<compile_context>
chip_gen: v7x
topology: tpu7x:2x2x1
jax: 0.10.0
libtpu: 0.0.40
codegen_flags: <defaults>
</compile_context>

<pallas_src>
import jax
import jax.numpy as jnp
from jax.experimental import pallas as pl
from jax.experimental.pallas import tpu as pltpu


LANE = 128
SUBLANE_ALIGN = 16            # aligned for both f32 (8 rows/vreg) and bf16 (16)
_VMEM_TILE_BUDGET = 12 * 1024 * 1024   # double-buffered stream budget (< v5e's
                                       # 16 MiB default scoped-VMEM limit)


def _round_up(x, m):
    return ((x + m - 1) // m) * m


# ----------------------------------------------------------------------------
# Parameter init (PyTorch nn.Linear style: U(-1/sqrt(fan_in), 1/sqrt(fan_in)))
# ----------------------------------------------------------------------------
def init_mlp_params(key, input_dim, hidden_dims, output_dim):
    dims = [input_dim] + list(hidden_dims) + [output_dim]
    params = []
    for i in range(len(dims) - 1):
        key, kw, kb = jax.random.split(key, 3)
        fan_in, fan_out = dims[i], dims[i + 1]
        bound = 1.0 / (fan_in ** 0.5)
        w = jax.random.uniform(kw, (fan_in, fan_out), jnp.float32, -bound, bound)
        b = jax.random.uniform(kb, (1, fan_out), jnp.float32, -bound, bound)
        params.append((w, b))
    return params


# ----------------------------------------------------------------------------
# Fused (block-diagonal) packed parameter slab + static layout description
# ----------------------------------------------------------------------------
def build_fused_params(feature_dim, policy_params, value_params,
                       dtype=jnp.float32):
    """Pack both heads into one (total_rows, slab_w) slab of `dtype`.

    Per layer l the slab holds:
      rows [w_off, w_off + padded_in[l])  : fused weight (block-diag for l>0)
      row  b_off                          : fused bias (segment padded to 16)
    Row offsets are multiples of 16 (sublane aligned for f32 AND bf16); fused
    output widths padded to multiples of 128 (lane dense).
    """
    n_layers = len(policy_params)
    assert len(value_params) == n_layers

    out_dims = [policy_params[l][0].shape[1] + value_params[l][0].shape[1]
                for l in range(n_layers)]
    padded_out = [_round_up(d, LANE) for d in out_dims]
    padded_in = [_round_up(feature_dim, SUBLANE_ALIGN)] + padded_out[:-1]
    slab_w = max(padded_out)

    offsets = []
    row = 0
    for l in range(n_layers):
        w_off = row
        row += padded_in[l]
        b_off = row
        row += SUBLANE_ALIGN                 # bias segment, keeps alignment
        offsets.append((w_off, b_off))
    total_rows = row

    slab = jnp.zeros((total_rows, slab_w), jnp.float32)
    for l in range(n_layers):
        w_pi, b_pi = policy_params[l]
        w_vf, b_vf = value_params[l]
        o_pi, o_vf = w_pi.shape[1], w_vf.shape[1]
        w_off, b_off = offsets[l]
        if l == 0:
            # shared features feed both heads: concatenate along output axis
            F = feature_dim
            slab = slab.at[w_off:w_off + F, 0:o_pi].set(w_pi)
            slab = slab.at[w_off:w_off + F, o_pi:o_pi + o_vf].set(w_vf)
        else:
            # block-diagonal: pi rows/cols first, vf rows/cols second
            i_pi, i_vf = w_pi.shape[0], w_vf.shape[0]
            slab = slab.at[w_off:w_off + i_pi, 0:o_pi].set(w_pi)
            slab = slab.at[w_off + i_pi:w_off + i_pi + i_vf,
                           o_pi:o_pi + o_vf].set(w_vf)
        slab = slab.at[b_off, 0:o_pi].set(b_pi.reshape(-1))
        slab = slab.at[b_off, o_pi:o_pi + o_vf].set(b_vf.reshape(-1))

    # ReLU only between layers; final Linear of each head has NO activation,
    # exactly matching CustomNetwork.create_mlp.
    layer_meta = tuple(
        (offsets[l][0], padded_in[l], offsets[l][1], padded_out[l],
         l < n_layers - 1)
        for l in range(n_layers))

    layout = dict(
        feature_pad=padded_in[0],
        out_width=padded_out[-1],
        pi_dim=policy_params[-1][0].shape[1],
        vf_dim=value_params[-1][0].shape[1],
        slab_shape=(total_rows, slab_w),
        layer_meta=layer_meta,
    )
    return slab.astype(dtype), layout


# ----------------------------------------------------------------------------
# Kernel: unrolled fused MLP, weights sliced from one packed VMEM slab
# ----------------------------------------------------------------------------
def _make_fused_kernel(layer_meta, compute_dtype):
    def kernel(x_ref, p_ref, out_ref):
        h = x_ref[...]
        for (w_off, k_in, b_off, k_out, relu) in layer_meta:   # static unroll
            w = p_ref[pl.ds(w_off, k_in), pl.ds(0, k_out)]
            b = p_ref[pl.ds(b_off, 1), pl.ds(0, k_out)].astype(jnp.float32)
            # MXU accumulates in f32; bias add / ReLU stay f32 (v5e has no
            # bf16 VPU); activations re-cast to the streamed dtype per layer.
            h = jnp.dot(h.astype(compute_dtype), w,
                        preferred_element_type=jnp.float32) + b
            if relu:
                h = jnp.maximum(h, 0.0)
        out_ref[...] = h.astype(out_ref.dtype)
    return kernel


def fused_mlp_forward(x, slab, layout, *, batch_tile=4096, out_dtype=None):
    """Run both heads in one pallas_call; returns a lane-dense (B, out_w) slab."""
    B, F = x.shape
    f_pad = layout["feature_pad"]
    out_w = layout["out_width"]
    compute_dtype = slab.dtype
    out_dtype = out_dtype or compute_dtype

    if x.dtype != compute_dtype:
        x = x.astype(compute_dtype)
    if f_pad != F:                      # only when F is not sublane-aligned
        x = jnp.pad(x, ((0, 0), (0, f_pad - F)))

    in_row_bytes = f_pad * jnp.dtype(compute_dtype).itemsize
    out_row_bytes = out_w * jnp.dtype(out_dtype).itemsize

    batch_tile = _round_up(max(batch_tile, SUBLANE_ALIGN), SUBLANE_ALIGN)
    if B <= SUBLANE_ALIGN:
        tb = B                          # tiny batch: single full-array block
    else:
        # >= 2 grid steps so the "parallel" batch axis shards across both
        # TensorCores on v7x; large tiles so per-step DMA dwarfs the ~0.35us
        # fixed pipeline overhead; cap so the double-buffered stream fits VMEM.
        vmem_cap = max(
            SUBLANE_ALIGN,
            (_VMEM_TILE_BUDGET // (2 * (in_row_bytes + out_row_bytes)))
            // SUBLANE_ALIGN * SUBLANE_ALIGN)
        tb = min(batch_tile, vmem_cap,
                 _round_up(pl.cdiv(B, 2), SUBLANE_ALIGN))
    grid = (pl.cdiv(B, tb),)
    # Ragged last block (B % tb != 0) is handled by Pallas: OOB output rows
    # are dropped on writeback and rows are independent, so no wrapper-side
    # batch pad / out[:B] slice is needed.

    layer_meta = layout["layer_meta"]
    flops = 2 * B * sum(k_in * k_out for (_, k_in, _, k_out, _) in layer_meta)
    slab_bytes = int(slab.size) * jnp.dtype(slab.dtype).itemsize
    cost = pl.CostEstimate(
        flops=int(flops),
        transcendentals=0,
        bytes_accessed=int(B * (in_row_bytes + out_row_bytes) + slab_bytes))

    kernel = _make_fused_kernel(layer_meta, compute_dtype)
    return pl.pallas_call(
        kernel,
        out_shape=jax.ShapeDtypeStruct((B, out_w), out_dtype),
        grid_spec=pltpu.PrefetchScalarGridSpec(
            num_scalar_prefetch=0,
            grid=grid,
            in_specs=[
                pl.BlockSpec((tb, f_pad), lambda i: (i, 0)),
                # weight slab: constant index -> fetched once, stays resident
                pl.BlockSpec(layout["slab_shape"], lambda i: (0, 0)),
            ],
            out_specs=pl.BlockSpec((tb, out_w), lambda i: (i, 0)),
        ),
        compiler_params=pltpu.CompilerParams(
            dimension_semantics=("parallel",)),
        cost_estimate=cost,
    )(x, slab)


# ----------------------------------------------------------------------------
# Module wrapper
# ----------------------------------------------------------------------------
class CustomNetworkPallas:
    """JAX/Pallas port of CustomNetwork: fused policy+value MLP heads."""

    def __init__(self, feature_dim, hidden_dims=(64, 64),
                 last_layer_dim_pi=64, last_layer_dim_vf=64, seed=0,
                 batch_tile=4096, param_dtype=jnp.float32, out_dtype=None):
        key = jax.random.PRNGKey(seed)
        k_pi, k_vf = jax.random.split(key)
        self.feature_dim = feature_dim
        self.latent_dim_pi = last_layer_dim_pi
        self.latent_dim_vf = last_layer_dim_vf
        self.policy_params = init_mlp_params(
            k_pi, feature_dim, hidden_dims, last_layer_dim_pi)
        self.value_params = init_mlp_params(
            k_vf, feature_dim, hidden_dims, last_layer_dim_vf)
        self.packed_params, self.layout = build_fused_params(
            feature_dim, self.policy_params, self.value_params,
            dtype=param_dtype)

        layout = self.layout
        pi_dim, vf_dim = last_layer_dim_pi, last_layer_dim_vf

        def _fused(features, slab):
            return fused_mlp_forward(features, slab, layout,
                                     batch_tile=batch_tile,
                                     out_dtype=out_dtype)

        def _split(features, slab):
            out = _fused(features, slab)
            return out[:, :pi_dim], out[:, pi_dim:pi_dim + vf_dim]

        # Preferred entry point: one lane-dense slab, no post-kernel 64-lane
        # slices (use when downstream can accept the fused layout).
        self._forward_fused = jax.jit(_fused)
        # API-compatible entry point (splits into pi / vf).
        self._forward = jax.jit(_split)

    def forward_fused(self, features):
        return self._forward_fused(features, self.packed_params)

    def forward(self, features):
        return self._forward(features, self.packed_params)

    def forward_actor(self, features):
        return self.forward(features)[0]

    def forward_critic(self, features):
        return self.forward(features)[1]


# ----------------------------------------------------------------------------
# Pure-JAX reference (mirrors CustomNetwork.create_mlp exactly)
# ----------------------------------------------------------------------------
def _mlp_ref(x, params):
    h = x
    for i, (w, b) in enumerate(params):
        h = h @ w + b
        if i < len(params) - 1:
            h = jnp.maximum(h, 0.0)
    return h


if __name__ == "__main__":
    feature_dim = 32
    batch = 4

    net = CustomNetworkPallas(feature_dim, hidden_dims=(64, 64),
                              last_layer_dim_pi=64, last_layer_dim_vf=64,
                              seed=0)

    key = jax.random.PRNGKey(0)
    features = jax.random.normal(key, (batch, feature_dim), dtype=jnp.float32)

    latent_pi, latent_vf = net.forward(features)
    latent_pi = jax.block_until_ready(latent_pi)
    latent_vf = jax.block_until_ready(latent_vf)

    ref_pi = _mlp_ref(features, net.policy_params)
    ref_vf = _mlp_ref(features, net.value_params)
    assert latent_pi.shape == (batch, 64) and latent_vf.shape == (batch, 64)
    assert jnp.allclose(latent_pi, ref_pi, atol=1e-5, rtol=1e-5)
    assert jnp.allclose(latent_vf, ref_vf, atol=1e-5, rtol=1e-5)

    # Tiled path: grid > 1 with a ragged last block, no wrapper pad / slice.
    big = jax.random.normal(jax.random.PRNGKey(1), (20, feature_dim),
                            dtype=jnp.float32)
    out_big = jax.block_until_ready(
        fused_mlp_forward(big, net.packed_params, net.layout, batch_tile=16))
    assert out_big.shape == (20, 128)
    assert jnp.allclose(out_big[:, :64], _mlp_ref(big, net.policy_params),
                        atol=1e-5, rtol=1e-5)
    assert jnp.allclose(out_big[:, 64:128], _mlp_ref(big, net.value_params),
                        atol=1e-5, rtol=1e-5)

    # bf16 streaming path (same params, halved HBM bytes, f32 accumulation).
    net_bf16 = CustomNetworkPallas(feature_dim, hidden_dims=(64, 64),
                                   last_layer_dim_pi=64, last_layer_dim_vf=64,
                                   seed=0, param_dtype=jnp.bfloat16)
    fused_bf16 = jax.block_until_ready(net_bf16.forward_fused(features))
    assert fused_bf16.shape == (batch, 128)
    assert fused_bf16.dtype == jnp.bfloat16
    assert jnp.allclose(fused_bf16[:, :64].astype(jnp.float32), ref_pi,
                        atol=5e-2, rtol=5e-2)
    assert jnp.allclose(fused_bf16[:, 64:128].astype(jnp.float32), ref_vf,
                        atol=5e-2, rtol=5e-2)

    print("KERNEL_OK")
</pallas_src>

<mosaic_0001>
module attributes {stable_mosaic.version = 11 : i64} {
  func.func @kernel(%arg0: i32, %arg1: memref<4x32xf32, #tpu.memory_space<vmem>>, %arg2: memref<336x128xf32, #tpu.memory_space<vmem>>, %arg3: memref<4x128xf32, #tpu.memory_space<vmem>>) attributes {dimension_semantics = [#tpu.dimension_semantics<parallel>], iteration_bounds = array<i64: 1>, scalar_prefetch = 0 : i64, scratch_operands = 0 : i64, tpu.core_type = #tpu.core_type<tc>, window_params = [{transform_indices = @transform_0, window_bounds = array<i64: 4, 32>}, {pipeline_mode = #tpu.pipeline_mode<synchronous>, transform_indices = @transform_1, window_bounds = array<i64: 336, 128>}, {transform_indices = @transform_2, window_bounds = array<i64: 4, 128>}]} {
    %c0 = arith.constant 0 : index
    %c0_0 = arith.constant 0 : index
    %0 = vector.load %arg1[%c0, %c0_0] : memref<4x32xf32, #tpu.memory_space<vmem>>, vector<4x32xf32>
    %c0_1 = arith.constant 0 : index
    %c0_2 = arith.constant 0 : index
    %1 = vector.load %arg2[%c0_1, %c0_2] : memref<336x128xf32, #tpu.memory_space<vmem>>, vector<32x128xf32>
    %c32 = arith.constant 32 : index
    %c0_3 = arith.constant 0 : index
    %2 = vector.load %arg2[%c32, %c0_3] : memref<336x128xf32, #tpu.memory_space<vmem>>, vector<1x128xf32>
    %cst = arith.constant dense<0.000000e+00> : vector<4x128xf32>
    %3 = tpu.matmul %0, %1, %cst {dimension_numbers = #tpu.dot_dimension_numbers<[1], [0], [0], [1], [0, 0, 1, 1], [], []>} : vector<4x32xf32>, vector<32x128xf32>, vector<4x128xf32> -> vector<4x128xf32>
    %4 = vector.broadcast %2 : vector<1x128xf32> to vector<4x128xf32>
    %5 = arith.addf %3, %4 : vector<4x128xf32>
    %cst_4 = arith.constant 0.000000e+00 : f32
    %6 = vector.broadcast %cst_4 : f32 to vector<4x128xf32>
    %7 = arith.maximumf %5, %6 : vector<4x128xf32>
    %c48 = arith.constant 48 : index
    %c0_5 = arith.constant 0 : index
    %8 = vector.load %arg2[%c48, %c0_5] : memref<336x128xf32, #tpu.memory_space<vmem>>, vector<128x128xf32>
    %c176 = arith.constant 176 : index
    %c0_6 = arith.constant 0 : index
    %9 = vector.load %arg2[%c176, %c0_6] : memref<336x128xf32, #tpu.memory_space<vmem>>, vector<1x128xf32>
    %cst_7 = arith.constant dense<0.000000e+00> : vector<4x128xf32>
    %10 = tpu.matmul %7, %8, %cst_7 {dimension_numbers = #tpu.dot_dimension_numbers<[1], [0], [0], [1], [0, 0, 1, 1], [], []>} : vector<4x128xf32>, vector<128x128xf32>, vector<4x128xf32> -> vector<4x128xf32>
    %11 = vector.broadcast %9 : vector<1x128xf32> to vector<4x128xf32>
    %12 = arith.addf %10, %11 : vector<4x128xf32>
    %cst_8 = arith.constant 0.000000e+00 : f32
    %13 = vector.broadcast %cst_8 : f32 to vector<4x128xf32>
    %14 = arith.maximumf %12, %13 : vector<4x128xf32>
    %c192 = arith.constant 192 : index
    %c0_9 = arith.constant 0 : index
    %15 = vector.load %arg2[%c192, %c0_9] : memref<336x128xf32, #tpu.memory_space<vmem>>, vector<128x128xf32>
    %c320 = arith.constant 320 : index
    %c0_10 = arith.constant 0 : index
    %16 = vector.load %arg2[%c320, %c0_10] : memref<336x128xf32, #tpu.memory_space<vmem>>, vector<1x128xf32>
    %cst_11 = arith.constant dense<0.000000e+00> : vector<4x128xf32>
    %17 = tpu.matmul %14, %15, %cst_11 {dimension_numbers = #tpu.dot_dimension_numbers<[1], [0], [0], [1], [0, 0, 1, 1], [], []>} : vector<4x128xf32>, vector<128x128xf32>, vector<4x128xf32> -> vector<4x128xf32>
    %18 = vector.broadcast %16 : vector<1x128xf32> to vector<4x128xf32>
    %19 = arith.addf %17, %18 : vector<4x128xf32>
    %c0_12 = arith.constant 0 : index
    %c0_13 = arith.constant 0 : index
    %20 = vector.load %arg3[%c0_12, %c0_13] : memref<4x128xf32, #tpu.memory_space<vmem>>, vector<4x128xf32>
    tpu.vector_store %arg3[%c0_12, %c0_13], %19 {strides = array<i32>} : memref<4x128xf32, #tpu.memory_space<vmem>>, vector<4x128xf32>,
    return
  }
  func.func @transform_0(%arg0: i32) -> (i32, i32) {
    %c0_i32 = arith.constant 0 : i32
    %c0_i32_0 = arith.constant 0 : i32
    return %arg0, %c0_i32 : i32, i32
  }
  func.func @transform_1(%arg0: i32) -> (i32, i32) {
    %c0_i32 = arith.constant 0 : i32
    %c0_i32_0 = arith.constant 0 : i32
    %c0_i32_1 = arith.constant 0 : i32
    return %c0_i32, %c0_i32_0 : i32, i32
  }
  func.func @transform_2(%arg0: i32) -> (i32, i32) {
    %c0_i32 = arith.constant 0 : i32
    %c0_i32_0 = arith.constant 0 : i32
    return %arg0, %c0_i32 : i32, i32
  }
}

</mosaic_0001>

<llo_original>
// kernel: _split.1
$region0: #{_split.1}
  #allocation0 [shape = 'u32[]', space=smem, size = 0x4, offset = 0x4, fixed_abs, tag = 'smem constant byte address 0x4 - core index']
  #allocation1 [shape = 'u32[144,128]{1,0:T(1,128)}', space=vmem, size = 0x12000, scoped, tag = 'internal scratch']
  %s0 = inlined_call_operand.hbm [shape: f32[4,32], index: 0, kind: input, shape index: {}]
  %s1 = inlined_call_operand.hbm [shape: f32[336,128], index: 1, kind: input, shape index: {}]
  %s2 = inlined_call_operand.vmem [shape: f32[4,128], index: 2, kind: output, shape index: {}]
  %s3 = sld [smem:[#allocation0]]
  $region26: #{_split.1} parent=0
    _
  %s5 = ssub.s32 1, %s3
  %s6 = scalar_select 0, %s5, %s3
  $region1: #{_split.1} parent=0
    #allocation2 [shape = 'u8[2048]{0}', space=vmem, size = 0x800, scoped, tag = 'input window, operand 0, single buffered']
    #allocation3 [shape = 's32[1]{0}', space=sflag, size = 0x4, scoped, tag = 'scoped memory for _split.1']
    #allocation4 [shape = 'u8[172032]{0}', space=vmem, size = 0x2a000, scoped, tag = 'input window, operand 1, single buffered']
    #allocation5 [shape = 's32[1]{0}', space=sflag, size = 0x4, scoped, tag = 'scoped memory for _split.1']
    %7 = vsyncpa [#allocation3], 0
    %8 = vsyncpa [#allocation5], 0
    // Predicated region
    $region2: #{_split.1} parent=1 // pred_check
      _
    $region3: #{_split.1} parent=1 // pred_check_branch
      %10 = sbr.rel (0) target = $region5
    $region4: #{_split.1} parent=1 // pred_region
      %s12 = ssub.s32 64, 64
      %13 = vsyncadd [#allocation3], %s12
      %s15 = sshll.u32 [#allocation2], 4
      %s16 = int_to_ptr.vmem [resolvable:$true] %s15
      %18 = dma.hbm_to_vmem [thread:$0]  %s0, 64, %s16, [#allocation3]
    $region5: #{_split.1} parent=1 // pred_fallthru
      _
    // Predicated region
    $region6: #{_split.1} parent=1 // pred_check
      _
    $region7: #{_split.1} parent=1 // pred_check_branch
      %20 = sbr.rel (0) target = $region9
    $region8: #{_split.1} parent=1 // pred_region
      %s22 = ssub.s32 5376, 5376
      %23 = vsyncadd [#allocation5], %s22
      %s24 = sshll.u32 [#allocation4], 4
      %s25 = int_to_ptr.vmem [resolvable:$true] %s24
      %30 = dma.hbm_to_vmem [thread:$0]  %s1, 5376, %s25, [#allocation5], 128, 128, 8
    $region9: #{_split.1} parent=1 // pred_fallthru
      _
    // Predicated region
    $region10: #{_split.1} parent=1 // pred_check
      _
    $region11: #{_split.1} parent=1 // pred_check_branch
      %32 = sbr.rel (0) target = $region13
    $region12: #{_split.1} parent=1 // pred_region
      %33 = dma.done [#allocation3], 64
    $region13: #{_split.1} parent=1 // pred_fallthru
      _
    // Predicated region
    $region14: #{_split.1} parent=1 // pred_check
      _
    $region15: #{_split.1} parent=1 // pred_check_branch
      %35 = sbr.rel (0) target = $region17
    $region16: #{_split.1} parent=1 // pred_region
      %36 = dma.done [#allocation5], 5376
    $region17: #{_split.1} parent=1 // pred_fallthru
      _
    %v37 = vld [vmem:[#allocation2] sm:$0xf]
    %v38 = vld [vmem:[#allocation4] sm:$0xff]
    %v39 = vld [vmem:[#allocation4 + $0x8] sm:$0xff]
    %v40 = vld [vmem:[#allocation4 + $0x10] sm:$0xff]
    %v41 = vld [vmem:[#allocation4 + $0x18] sm:$0xff]
    %v42 = vld [vmem:[#allocation4 + $0x20] sm:$0x1]
    %v43 = vlaneseq
    %v44 = vshrl.u32 %v43, 7
    %v45 = vsub.s32 0, %v44
    %v46 = vrot.slane %v42, %v45
    %vm47 = vcmask 261120
    %v49 = vsel %vm47, %v37, 0
    %51 = vmatprep.subr.mxu0 0.0
    %52 = vmatpush1.msra.mxu0 %v38
    %53 = vmatprep.subr.mxu0 0.0
    %54 = vmatpush1.msra.mxu0 %v39
    %55 = vmatprep.subr.mxu0 0.0
    %56 = vmatpush1.msra.mxu0 %v40
    %57 = vmatprep.subr.mxu0 0.0
    %58 = vmatpush1.msra.mxu0 %v41
    %59 = vmatprep.subr.mxu0 0.0
    %60 = vmatpush1.msra.mxu0 0.0
    %61 = vmatprep.subr.mxu0 0.0
    %62 = vmatpush1.msra.mxu0 0.0
    %63 = vmatprep.subr.mxu0 0.0
    %64 = vmatpush1.msra.mxu0 0.0
    %65 = vmatprep.subr.mxu0 0.0
    %66 = vmatpush1.msra.mxu0 0.0
    %67 = vmatprep.subr.mxu0 0.0
    %68 = vmatpush1.msra.mxu0 0.0
    %69 = vmatprep.subr.mxu0 0.0
    %70 = vmatpush1.msra.mxu0 0.0
    %71 = vmatprep.subr.mxu0 0.0
    %72 = vmatpush1.msra.mxu0 0.0
    %73 = vmatprep.subr.mxu0 0.0
    %74 = vmatpush1.msra.mxu0 0.0
    %75 = vmatprep.subr.mxu0 0.0
    %76 = vmatpush1.msra.mxu0 0.0
    %77 = vmatprep.subr.mxu0 0.0
    %78 = vmatpush1.msra.mxu0 0.0
    %79 = vmatprep.subr.mxu0 0.0
    %80 = vmatpush1.msra.mxu0 0.0
    %81 = vmatprep.subr.mxu0 0.0
    %82 = vmatpush1.msra.mxu0 0.0
    %83 = vmatprep.subr.mxu0 0.0
    %84 = vmatpush1.msra.mxu0 0.0
    %85 = vmatprep.subr.mxu0 0.0
    %86 = vmatpush1.msra.mxu0 0.0
    %87 = vmatprep.subr.mxu0 0.0
    %88 = vmatpush1.msra.mxu0 0.0
    %89 = vmatprep.subr.mxu0 0.0
    %90 = vmatpush1.msra.mxu0 0.0
    %91 = vmatprep.subr.mxu0 0.0
    %92 = vmatpush1.msra.mxu0 0.0
    %93 = vmatprep.subr.mxu0 0.0
    %94 = vmatpush1.msra.mxu0 0.0
    %95 = vmatprep.subr.mxu0 0.0
    %96 = vmatpush1.msra.mxu0 0.0
    %97 = vmatprep.subr.mxu0 0.0
    %98 = vmatpush1.msra.mxu0 0.0
    %99 = vmatprep.subr.mxu0 0.0
    %100 = vmatpush1.msra.mxu0 0.0
    %101 = vmatprep.subr.mxu0 0.0
    %102 = vmatpush1.msra.mxu0 0.0
    %103 = vmatprep.subr.mxu0 0.0
    %104 = vmatpush1.msra.mxu0 0.0
    %105 = vmatprep.subr.mxu0 0.0
    %106 = vmatpush1.msra.mxu0 0.0
    %107 = vmatprep.subr.mxu0 0.0
    %108 = vmatpush1.msra.mxu0 0.0
    %109 = vmatprep.subr.mxu0 0.0
    %110 = vmatpush1.msra.mxu0 0.0
    %111 = vmatprep.subr.mxu0 0.0
    %112 = vmatpush1.msra.mxu0 0.0
    %113 = vmatprep.subr.mxu0 0.0
    %114 = vmatpush1.msra.mxu0 0.0
    %115 = vmatprep.mubr.f32.mxu0 0.0
    %116 = vmatmul.mubr.f32.gmra.mrb[0].mxu0 %v49
    %v117 = vpop.f32.mrb[0].mxu0
    %v118 = vadd.f32 %v46, %v117
    %v119 = vpop.f32.mrb[0].mxu0
    %120 = vdwg.mxu0
    %v121 = vmax.f32 %v118, 0.0
    %v122 = vld [vmem:[#allocation4 + $0x30] sm:$0xff]
    %v123 = vld [vmem:[#allocation4 + $0x38] sm:$0xff]
    %v124 = vld [vmem:[#allocation4 + $0x40] sm:$0xff]
    %v125 = vld [vmem:[#allocation4 + $0x48] sm:$0xff]
    %v126 = vld [vmem:[#allocation4 + $0x50] sm:$0xff]
    %v127 = vld [vmem:[#allocation4 + $0x58] sm:$0xff]
    %v128 = vld [vmem:[#allocation4 + $0x60] sm:$0xff]
    %v129 = vld [vmem:[#allocation4 + $0x68] sm:$0xff]
    %v130 = vld [vmem:[#allocation4 + $0x70] sm:$0xff]
    %v131 = vld [vmem:[#allocation4 + $0x78] sm:$0xff]
    %v132 = vld [vmem:[#allocation4 + $0x80] sm:$0xff]
    %v133 = vld [vmem:[#allocation4 + $0x88] sm:$0xff]
    %v134 = vld [vmem:[#allocation4 + $0x90] sm:$0xff]
    %v135 = vld [vmem:[#allocation4 + $0x98] sm:$0xff]
    %v136 = vld [vmem:[#allocation4 + $0xa0] sm:$0xff]
    %v137 = vld [vmem:[#allocation4 + $0xa8] sm:$0xff]
    %v138 = vld [vmem:[#allocation4 + $0xb0] sm:$0x1]
    %v139 = vlaneseq
    %v140 = vshrl.u32 %v139, 7
    %v141 = vsub.s32 0, %v140
    %v142 = vrot.slane %v138, %v141
    %143 = vmatprep.subr.mxu0 0.0
    %144 = vmatpush1.msra.mxu0 %v122
    %145 = vmatprep.subr.mxu0 0.0
    %146 = vmatpush1.msra.mxu0 %v123
    %147 = vmatprep.subr.mxu0 0.0
    %148 = vmatpush1.msra.mxu0 %v124
    %149 = vmatprep.subr.mxu0 0.0
    %150 = vmatpush1.msra.mxu0 %v125
    %151 = vmatprep.subr.mxu0 0.0
    %152 = vmatpush1.msra.mxu0 %v126
    %153 = vmatprep.subr.mxu0 0.0
    %154 = vmatpush1.msra.mxu0 %v127
    %155 = vmatprep.subr.mxu0 0.0
    %156 = vmatpush1.msra.mxu0 %v128
    %157 = vmatprep.subr.mxu0 0.0
    %158 = vmatpush1.msra.mxu0 %v129
    %159 = vmatprep.subr.mxu0 0.0
    %160 = vmatpush1.msra.mxu0 %v130
    %161 = vmatprep.subr.mxu0 0.0
    %162 = vmatpush1.msra.mxu0 %v131
    %163 = vmatprep.subr.mxu0 0.0
    %164 = vmatpush1.msra.mxu0 %v132
    %165 = vmatprep.subr.mxu0 0.0
    %166 = vmatpush1.msra.mxu0 %v133
    %167 = vmatprep.subr.mxu0 0.0
    %168 = vmatpush1.msra.mxu0 %v134
    %169 = vmatprep.subr.mxu0 0.0
    %170 = vmatpush1.msra.mxu0 %v135
    %171 = vmatprep.subr.mxu0 0.0
    %172 = vmatpush1.msra.mxu0 %v136
    %173 = vmatprep.subr.mxu0 0.0
    %174 = vmatpush1.msra.mxu0 %v137
    %175 = vmatprep.subr.mxu0 0.0
    %176 = vmatpush1.msra.mxu0 0.0
    %177 = vmatprep.subr.mxu0 0.0
    %178 = vmatpush1.msra.mxu0 0.0
    %179 = vmatprep.subr.mxu0 0.0
    %180 = vmatpush1.msra.mxu0 0.0
    %181 = vmatprep.subr.mxu0 0.0
    %182 = vmatpush1.msra.mxu0 0.0
    %183 = vmatprep.subr.mxu0 0.0
    %184 = vmatpush1.msra.mxu0 0.0
    %185 = vmatprep.subr.mxu0 0.0
    %186 = vmatpush1.msra.mxu0 0.0
    %187 = vmatprep.subr.mxu0 0.0
    %188 = vmatpush1.msra.mxu0 0.0
    %189 = vmatprep.subr.mxu0 0.0
    %190 = vmatpush1.msra.mxu0 0.0
    %191 = vmatprep.subr.mxu0 0.0
    %192 = vmatpush1.msra.mxu0 0.0
    %193 = vmatprep.subr.mxu0 0.0
    %194 = vmatpush1.msra.mxu0 0.0
    %195 = vmatprep.subr.mxu0 0.0
    %196 = vmatpush1.msra.mxu0 0.0
    %197 = vmatprep.subr.mxu0 0.0
    %198 = vmatpush1.msra.mxu0 0.0
    %199 = vmatprep.subr.mxu0 0.0
    %200 = vmatpush1.msra.mxu0 0.0
    %201 = vmatprep.subr.mxu0 0.0
    %202 = vmatpush1.msra.mxu0 0.0
    %203 = vmatprep.subr.mxu0 0.0
    %204 = vmatpush1.msra.mxu0 0.0
    %205 = vmatprep.subr.mxu0 0.0
    %206 = vmatpush1.msra.mxu0 0.0
    %207 = vmatprep.mubr.f32.mxu0 0.0
    %208 = vmatmul.mubr.f32.gmra.mrb[0].mxu0 %v121
    %v209 = vpop.f32.mrb[0].mxu0
    %v210 = vadd.f32 %v142, %v209
    %v211 = vpop.f32.mrb[0].mxu0
    %212 = vdwg.mxu0
    %v213 = vmax.f32 %v210, 0.0
    %v214 = vld [vmem:[#allocation4 + $0xc0] sm:$0xff]
    %v215 = vld [vmem:[#allocation4 + $0xc8] sm:$0xff]
    %v216 = vld [vmem:[#allocation4 + $0xd0] sm:$0xff]
    %v217 = vld [vmem:[#allocation4 + $0xd8] sm:$0xff]
    %v218 = vld [vmem:[#allocation4 + $0xe0] sm:$0xff]
    %v219 = vld [vmem:[#allocation4 + $0xe8] sm:$0xff]
    %v220 = vld [vmem:[#allocation4 + $0xf0] sm:$0xff]
    %v221 = vld [vmem:[#allocation4 + $0xf8] sm:$0xff]
    %v222 = vld [vmem:[#allocation4 + $0x100] sm:$0xff]
    %v223 = vld [vmem:[#allocation4 + $0x108] sm:$0xff]
    %v224 = vld [vmem:[#allocation4 + $0x110] sm:$0xff]
    %v225 = vld [vmem:[#allocation4 + $0x118] sm:$0xff]
    %v226 = vld [vmem:[#allocation4 + $0x120] sm:$0xff]
    %v227 = vld [vmem:[#allocation4 + $0x128] sm:$0xff]
    %v228 = vld [vmem:[#allocation4 + $0x130] sm:$0xff]
    %v229 = vld [vmem:[#allocation4 + $0x138] sm:$0xff]
    %v230 = vld [vmem:[#allocation4 + $0x140] sm:$0x1]
    %v231 = vlaneseq
    %v232 = vshrl.u32 %v231, 7
    %v233 = vsub.s32 0, %v232
    %v234 = vrot.slane %v230, %v233
    %235 = vmatprep.subr.mxu0 0.0
    %236 = vmatpush1.msra.mxu0 %v214
    %237 = vmatprep.subr.mxu0 0.0
    %238 = vmatpush1.msra.mxu0 %v215
    %239 = vmatprep.subr.mxu0 0.0
    %240 = vmatpush1.msra.mxu0 %v216
    %241 = vmatprep.subr.mxu0 0.0
    %242 = vmatpush1.msra.mxu0 %v217
    %243 = vmatprep.subr.mxu0 0.0
    %244 = vmatpush1.msra.mxu0 %v218
    %245 = vmatprep.subr.mxu0 0.0
    %246 = vmatpush1.msra.mxu0 %v219
    %247 = vmatprep.subr.mxu0 0.0
    %248 = vmatpush1.msra.mxu0 %v220
    %249 = vmatprep.subr.mxu0 0.0
    %250 = vmatpush1.msra.mxu0 %v221
    %251 = vmatprep.subr.mxu0 0.0
    %252 = vmatpush1.msra.mxu0 %v222
    %253 = vmatprep.subr.mxu0 0.0
    %254 = vmatpush1.msra.mxu0 %v223
    %255 = vmatprep.subr.mxu0 0.0
    %256 = vmatpush1.msra.mxu0 %v224
    %257 = vmatprep.subr.mxu0 0.0
    %258 = vmatpush1.msra.mxu0 %v225
    %259 = vmatprep.subr.mxu0 0.0
    %260 = vmatpush1.msra.mxu0 %v226
    %261 = vmatprep.subr.mxu0 0.0
    %262 = vmatpush1.msra.mxu0 %v227
    %263 = vmatprep.subr.mxu0 0.0
    %264 = vmatpush1.msra.mxu0 %v228
    %265 = vmatprep.subr.mxu0 0.0
    %266 = vmatpush1.msra.mxu0 %v229
    %267 = vmatprep.subr.mxu0 0.0
    %268 = vmatpush1.msra.mxu0 0.0
    %269 = vmatprep.subr.mxu0 0.0
    %270 = vmatpush1.msra.mxu0 0.0
    %271 = vmatprep.subr.mxu0 0.0
    %272 = vmatpush1.msra.mxu0 0.0
    %273 = vmatprep.subr.mxu0 0.0
    %274 = vmatpush1.msra.mxu0 0.0
    %275 = vmatprep.subr.mxu0 0.0
    %276 = vmatpush1.msra.mxu0 0.0
    %277 = vmatprep.subr.mxu0 0.0
    %278 = vmatpush1.msra.mxu0 0.0
    %279 = vmatprep.subr.mxu0 0.0
    %280 = vmatpush1.msra.mxu0 0.0
    %281 = vmatprep.subr.mxu0 0.0
    %282 = vmatpush1.msra.mxu0 0.0
    %283 = vmatprep.subr.mxu0 0.0
    %284 = vmatpush1.msra.mxu0 0.0
    %285 = vmatprep.subr.mxu0 0.0
    %286 = vmatpush1.msra.mxu0 0.0
    %287 = vmatprep.subr.mxu0 0.0
    %288 = vmatpush1.msra.mxu0 0.0
    %289 = vmatprep.subr.mxu0 0.0
    %290 = vmatpush1.msra.mxu0 0.0
    %291 = vmatprep.subr.mxu0 0.0
    %292 = vmatpush1.msra.mxu0 0.0
    %293 = vmatprep.subr.mxu0 0.0
    %294 = vmatpush1.msra.mxu0 0.0
    %295 = vmatprep.subr.mxu0 0.0
    %296 = vmatpush1.msra.mxu0 0.0
    %297 = vmatprep.subr.mxu0 0.0
    %298 = vmatpush1.msra.mxu0 0.0
    %299 = vmatprep.mubr.f32.mxu0 0.0
    %300 = vmatmul.mubr.f32.gmra.mrb[0].mxu0 %v213
    %v301 = vpop.f32.mrb[0].mxu0
    %v302 = vadd.f32 %v234, %v301
    %v303 = vpop.f32.mrb[0].mxu0
    %304 = vdwg.mxu0
    %305 = vst [vmem:[%s2] sm:$0xf] %v302
    // Predicated region
    $region18: #{_split.1} parent=1 // pred_check
      _
    $region19: #{_split.1} parent=1 // pred_check_branch
      %307 = sbr.rel (0) target = $region21
    $region20: #{_split.1} parent=1 // pred_region
      _
    $region21: #{_split.1} parent=1 // pred_fallthru
      _
    // Predicated region
    $region22: #{_split.1} parent=1 // pred_check
      _
    $region23: #{_split.1} parent=1 // pred_check_branch
      %309 = sbr.rel (0) target = $region25
    $region24: #{_split.1} parent=1 // pred_region
      _
    $region25: #{_split.1} parent=1 // pred_fallthru
      _
    %310 = vsyncpa [#allocation3], 1
    %311 = vsyncpa [#allocation5], 1

</llo_original>
